<compile_context>
chip_gen: v6e
topology: v6e:2x2x1
jax: 0.10.0
libtpu: 0.0.40
codegen_flags: <defaults>
</compile_context>

<pallas_src>
import functools
import math

import jax
import jax.numpy as jnp
from jax.experimental import pallas as pl
from jax.experimental.pallas import tpu as pltpu

_MIB = 1024 * 1024


def _dct_matrix(n: int) -> jnp.ndarray:
    """Orthonormal DCT-II matrix D (D @ D.T == I), shape (n, n), float32."""
    k = jnp.arange(n, dtype=jnp.float32)[:, None]
    m = jnp.arange(n, dtype=jnp.float32)[None, :]
    d = jnp.sqrt(2.0 / n) * jnp.cos(jnp.pi * (2.0 * m + 1.0) * k / (2.0 * n))
    d = d.at[0, :].multiply(1.0 / jnp.sqrt(2.0))
    return d.astype(jnp.float32)


def _band_gain(band_w: jnp.ndarray, h: int, w: int, n_bands: int,
               alpha: float) -> jnp.ndarray:
    """Per-channel spectral gain mask, shape (C, H, W), float32."""
    fi = jnp.arange(h, dtype=jnp.float32) / max(h - 1, 1)
    fj = jnp.arange(w, dtype=jnp.float32) / max(w - 1, 1)
    r = jnp.maximum(fi[:, None], fj[None, :])                  # (H, W) in [0, 1]
    band = jnp.minimum((r * n_bands).astype(jnp.int32), n_bands - 1)
    per_band = 1.0 - alpha * jax.nn.sigmoid(band_w)            # (C, n_bands)
    return per_band[:, band]                                   # (C, H, W)


@functools.lru_cache(maxsize=None)
def _vmem_capacity_bytes() -> int:
    """Physical per-core VMEM; falls back to the v7x minimum (64 MiB)."""
    try:
        cap = int(pltpu.get_tpu_info().vmem_capacity_bytes)
        if cap >= 32 * _MIB:
            return cap
    except Exception:
        pass
    return 64 * _MIB


def _round_up(x: int, m: int) -> int:
    return ((x + m - 1) // m) * m


def _choose_block_rows(n: int, c: int, hw: int, x_itemsize: int,
                       mm_itemsize: int, vmem_budget: int) -> int:
    """Flattened planes (rows) per grid step.

    Constraints / targets:
      * multiple of C (per-channel gain alignment) and of 8 (sublane layout),
      * ~512 rows (real MXU M dim, amortizes ~0.35us/step overhead),
      * fits the generation-aware VMEM budget,
      * capped at ~N/2 so the grid has >= 2 steps (v7x megacore, DMA overlap).
    """
    unit = (c * 8) // math.gcd(c, 8)           # lcm(C, 8)
    if n <= unit:
        return n                               # single full-extent block
    # Per-row VMEM: x in/out double-buffered, gain single-buffered (mm dtype),
    # ~3 f32 temporaries plus 2 matmul-dtype temporaries.
    per_row = hw * (4 * x_itemsize + 3 * mm_itemsize + 3 * 4)
    fixed = 2 * hw * hw * mm_itemsize          # single-buffered DCT operators
    max_rows = int((vmem_budget * 0.85 - fixed) // per_row)
    nblk = min(_round_up(512, unit), (max_rows // unit) * unit)
    nblk = max(nblk, unit)
    nblk = min(nblk, _round_up(pl.cdiv(n, 2), unit))
    return nblk


def _sns_kernel(x_ref, mf_ref, mi_ref, g_ref, o_ref):
    # x_ref : (NBLK, HW)  block of flattened (H*W along lanes) spatial planes
    # mf_ref: (HW, HW)    forward 2D DCT operator = kron(Dh, Dw)^T  (bf16/f32)
    # mi_ref: (HW, HW)    inverse 2D DCT operator = kron(Dh, Dw)    (bf16/f32)
    # g_ref : (NBLK, HW)  per-plane spectral gain (matmul dtype), constant blk
    # Forward 2D DCT of every plane in one lane-dense MXU matmul (x is cast
    # directly to the MXU dtype; no persistent f32 copy is kept live).
    s = jnp.dot(x_ref[...].astype(mf_ref.dtype), mf_ref[...],
                preferred_element_type=jnp.float32)
    # Band modulation in the spectral domain (f32 VPU work).
    s = s * g_ref[...].astype(jnp.float32)
    # Inverse 2D DCT (transpose was hoisted to the wrapper).
    y = jnp.dot(s.astype(mi_ref.dtype), mi_ref[...],
                preferred_element_type=jnp.float32)
    # SpectralNoiseSuppression: x * frfbm(x); re-read x from the resident
    # input buffer (cheap vld), lane-dense store (last dim = HW).
    o_ref[...] = (x_ref[...].astype(jnp.float32) * y).astype(o_ref.dtype)


@functools.partial(jax.jit,
                   static_argnames=("n_bands", "alpha", "matmul_dtype"))
def spectral_noise_suppression(x, band_w, *, n_bands=4, alpha=0.5,
                               matmul_dtype=jnp.bfloat16):
    b, c, h, w = x.shape
    hw = h * w
    n = b * c

    dh = _dct_matrix(h)
    dw = _dct_matrix(w)
    # Fused 2D-DCT operators; the transpose is precomputed (no in-kernel .T).
    m_inv = jnp.kron(dh, dw).astype(matmul_dtype)              # (HW, HW)
    m_fwd = jnp.kron(dh, dw).T.astype(matmul_dtype)            # (HW, HW)

    x_itemsize = jnp.dtype(x.dtype).itemsize
    mm_itemsize = jnp.dtype(matmul_dtype).itemsize

    vmem_cap = _vmem_capacity_bytes()
    # Generation-aware working budget: ~44 MiB of v7x's 64 MiB,
    # ~96 MiB of the 128 MiB available on v5e/v6e.
    vmem_budget = 44 * _MIB if vmem_cap <= 64 * _MIB else 96 * _MIB

    nblk = _choose_block_rows(n, c, hw, x_itemsize, mm_itemsize, vmem_budget)
    grid = (pl.cdiv(n, nblk),)

    # Gain for ONE block: channel pattern repeats every C rows and
    # nblk % C == 0, so every grid step reuses the same block (constant
    # index_map, single-buffered, fetched from HBM only once).  Stored in the
    # matmul dtype to keep its VMEM footprint small.
    gain = _band_gain(band_w, h, w, n_bands, alpha)            # (C, H, W) f32
    gain_blk = jnp.tile(gain.reshape(c, hw),
                        (nblk // c, 1)).astype(matmul_dtype)   # (nblk, HW)

    x_flat = x.reshape(n, hw)           # free reshape of contiguous NCHW

    flops = 4 * n * hw * hw + 3 * n * hw
    bytes_accessed = (2 * n * hw * x_itemsize                  # x in, out
                      + 2 * hw * hw * mm_itemsize              # operators once
                      + nblk * hw * mm_itemsize)               # gain once

    vmem_need = (4 * nblk * hw * x_itemsize                    # in/out, 2 bufs
                 + 2 * hw * hw * mm_itemsize                   # operators, 1 buf
                 + nblk * hw * mm_itemsize                     # gain, 1 buf
                 + nblk * hw * (3 * 4 + 2 * mm_itemsize))      # temporaries
    vmem_limit = int(min(max(vmem_need + 8 * _MIB, 32 * _MIB),
                         vmem_cap - 8 * _MIB))

    def const_spec(shape):
        # Constant-index operands: single-buffered (no pointless double buffer).
        return pl.BlockSpec(shape, lambda g: (0, 0),
                            pipeline_mode=pl.Buffered(1))

    out_flat = pl.pallas_call(
        _sns_kernel,
        out_shape=jax.ShapeDtypeStruct((n, hw), x.dtype),
        grid=grid,
        in_specs=[
            pl.BlockSpec((nblk, hw), lambda g: (g, 0)),        # x planes
            const_spec((hw, hw)),                              # fwd operator
            const_spec((hw, hw)),                              # inv operator
            const_spec((nblk, hw)),                            # gain (reused)
        ],
        out_specs=pl.BlockSpec((nblk, hw), lambda g: (g, 0)),
        compiler_params=pltpu.CompilerParams(
            dimension_semantics=("parallel",),
            vmem_limit_bytes=vmem_limit),
        cost_estimate=pl.CostEstimate(flops=flops, transcendentals=0,
                                      bytes_accessed=bytes_accessed),
    )(x_flat, m_fwd, m_inv, gain_blk)

    return out_flat.reshape(b, c, h, w)


def _reference_f32(x, band_w, *, n_bands=4, alpha=0.5):
    """Pure-JAX f32 reference (separable DCT) of the same semantics."""
    b, c, h, w = x.shape
    dh = _dct_matrix(h)
    dw = _dct_matrix(w)
    gain = _band_gain(band_w, h, w, n_bands, alpha)
    xs = x.astype(jnp.float32)
    s = jnp.einsum("hk,bckw->bchw", dh, xs)
    s = jnp.einsum("bchw,vw->bchv", s, dw)
    s = s * gain[None]
    y = jnp.einsum("kh,bckw->bchw", dh, s)
    y = jnp.einsum("bchw,wv->bchv", y, dw)
    return (xs * y).astype(x.dtype)


def _reference_matmul(x, band_w, *, n_bands=4, alpha=0.5,
                      matmul_dtype=jnp.bfloat16):
    """Pure-JAX reference matching the kernel's fused-operator / MXU dtypes."""
    b, c, h, w = x.shape
    hw = h * w
    dh = _dct_matrix(h)
    dw = _dct_matrix(w)
    m_inv = jnp.kron(dh, dw).astype(matmul_dtype)
    m_fwd = jnp.kron(dh, dw).T.astype(matmul_dtype)
    gain = _band_gain(band_w, h, w, n_bands,
                      alpha).reshape(c, hw).astype(matmul_dtype)
    x32 = x.reshape(b * c, hw).astype(jnp.float32)
    s = jnp.dot(x32.astype(matmul_dtype), m_fwd,
                preferred_element_type=jnp.float32)
    s = s * jnp.tile(gain, (b, 1)).astype(jnp.float32)
    y = jnp.dot(s.astype(matmul_dtype), m_inv,
                preferred_element_type=jnp.float32)
    return (x32 * y).astype(x.dtype).reshape(b, c, h, w)


if __name__ == "__main__":
    key = jax.random.PRNGKey(0)
    kx, kw = jax.random.split(key)

    B, C, H, W = 2, 4, 16, 16
    N_BANDS, ALPHA = 4, 0.5

    x = jax.random.normal(kx, (B, C, H, W), dtype=jnp.float32)
    # Deterministic "learned" per-channel, per-band weights of FrFBM.
    band_w = 0.1 * jax.random.normal(kw, (C, N_BANDS), dtype=jnp.float32)

    ref32 = _reference_f32(x, band_w, n_bands=N_BANDS, alpha=ALPHA)

    # Exact-math check: f32 MXU path against the separable f32 reference.
    out32 = spectral_noise_suppression(x, band_w, n_bands=N_BANDS, alpha=ALPHA,
                                       matmul_dtype=jnp.float32)
    out32 = jax.block_until_ready(out32)
    assert out32.shape == (B, C, H, W) and out32.dtype == x.dtype
    assert float(jnp.max(jnp.abs(out32 - ref32))) < 1e-4

    # Default fast path: bf16 MXU matmuls (v6e/v7x), f32 accumulation.
    out = spectral_noise_suppression(x, band_w, n_bands=N_BANDS, alpha=ALPHA)
    out = jax.block_until_ready(out)
    ref_mm = _reference_matmul(x, band_w, n_bands=N_BANDS, alpha=ALPHA)
    assert out.shape == (B, C, H, W) and out.dtype == x.dtype
    assert float(jnp.max(jnp.abs(out - ref_mm))) < 2e-3   # matched-dtype ref
    assert float(jnp.max(jnp.abs(out - ref32))) < 0.25    # bf16-level sanity

    # Multi-step grid with a partial final block (n=20 rows -> nblk=16,
    # grid=(2,)): exercises the cdiv-grid / edge-padding path.
    B2 = 5
    x2 = jax.random.normal(kx, (B2, C, H, W), dtype=jnp.float32)
    ref2 = _reference_f32(x2, band_w, n_bands=N_BANDS, alpha=ALPHA)
    out2 = spectral_noise_suppression(x2, band_w, n_bands=N_BANDS, alpha=ALPHA,
                                      matmul_dtype=jnp.float32)
    out2 = jax.block_until_ready(out2)
    assert out2.shape == (B2, C, H, W)
    assert float(jnp.max(jnp.abs(out2 - ref2))) < 1e-4

    print("KERNEL_OK")
</pallas_src>

<mosaic_0001>
module attributes {stable_mosaic.version = 11 : i64} {
  func.func @_sns_kernel(%arg0: i32, %arg1: memref<8x256xf32, #tpu.memory_space<vmem>>, %arg2: memref<256x256xf32, #tpu.memory_space<vmem>>, %arg3: memref<256x256xf32, #tpu.memory_space<vmem>>, %arg4: memref<8x256xf32, #tpu.memory_space<vmem>>, %arg5: memref<8x256xf32, #tpu.memory_space<vmem>>) attributes {dimension_semantics = [#tpu.dimension_semantics<parallel>], iteration_bounds = array<i64: 1>, scalar_prefetch = 0 : i64, scratch_operands = 0 : i64, tpu.core_type = #tpu.core_type<tc>, window_params = [{transform_indices = @transform_0, window_bounds = array<i64: 8, 256>}, {pipeline_mode = #tpu.pipeline_mode<synchronous>, transform_indices = @transform_1, window_bounds = array<i64: 256, 256>}, {pipeline_mode = #tpu.pipeline_mode<synchronous>, transform_indices = @transform_2, window_bounds = array<i64: 256, 256>}, {pipeline_mode = #tpu.pipeline_mode<synchronous>, transform_indices = @transform_3, window_bounds = array<i64: 8, 256>}, {transform_indices = @transform_4, window_bounds = array<i64: 8, 256>}]} {
    %c0 = arith.constant 0 : index
    %c0_0 = arith.constant 0 : index
    %0 = vector.load %arg1[%c0, %c0_0] : memref<8x256xf32, #tpu.memory_space<vmem>>, vector<8x256xf32>
    %c0_1 = arith.constant 0 : index
    %c0_2 = arith.constant 0 : index
    %1 = vector.load %arg2[%c0_1, %c0_2] : memref<256x256xf32, #tpu.memory_space<vmem>>, vector<256x256xf32>
    %cst = arith.constant dense<0.000000e+00> : vector<8x256xf32>
    %2 = tpu.matmul %0, %1, %cst {dimension_numbers = #tpu.dot_dimension_numbers<[1], [0], [0], [1], [0, 0, 1, 1], [], []>} : vector<8x256xf32>, vector<256x256xf32>, vector<8x256xf32> -> vector<8x256xf32>
    %c0_3 = arith.constant 0 : index
    %c0_4 = arith.constant 0 : index
    %3 = vector.load %arg4[%c0_3, %c0_4] : memref<8x256xf32, #tpu.memory_space<vmem>>, vector<8x256xf32>
    %4 = arith.mulf %2, %3 : vector<8x256xf32>
    %c0_5 = arith.constant 0 : index
    %c0_6 = arith.constant 0 : index
    %5 = vector.load %arg3[%c0_5, %c0_6] : memref<256x256xf32, #tpu.memory_space<vmem>>, vector<256x256xf32>
    %cst_7 = arith.constant dense<0.000000e+00> : vector<8x256xf32>
    %6 = tpu.matmul %4, %5, %cst_7 {dimension_numbers = #tpu.dot_dimension_numbers<[1], [0], [0], [1], [0, 0, 1, 1], [], []>} : vector<8x256xf32>, vector<256x256xf32>, vector<8x256xf32> -> vector<8x256xf32>
    %c0_8 = arith.constant 0 : index
    %c0_9 = arith.constant 0 : index
    %7 = vector.load %arg1[%c0_8, %c0_9] : memref<8x256xf32, #tpu.memory_space<vmem>>, vector<8x256xf32>
    %8 = arith.mulf %7, %6 : vector<8x256xf32>
    %c0_10 = arith.constant 0 : index
    %c0_11 = arith.constant 0 : index
    %9 = vector.load %arg5[%c0_10, %c0_11] : memref<8x256xf32, #tpu.memory_space<vmem>>, vector<8x256xf32>
    tpu.vector_store %arg5[%c0_10, %c0_11], %8 {strides = array<i32>} : memref<8x256xf32, #tpu.memory_space<vmem>>, vector<8x256xf32>,
    return
  }
  func.func @transform_0(%arg0: i32) -> (i32, i32) {
    %c0_i32 = arith.constant 0 : i32
    %c0_i32_0 = arith.constant 0 : i32
    return %arg0, %c0_i32 : i32, i32
  }
  func.func @transform_1(%arg0: i32) -> (i32, i32) {
    %c0_i32 = arith.constant 0 : i32
    %c0_i32_0 = arith.constant 0 : i32
    %c0_i32_1 = arith.constant 0 : i32
    return %c0_i32, %c0_i32_0 : i32, i32
  }
  func.func @transform_2(%arg0: i32) -> (i32, i32) {
    %c0_i32 = arith.constant 0 : i32
    %c0_i32_0 = arith.constant 0 : i32
    %c0_i32_1 = arith.constant 0 : i32
    return %c0_i32, %c0_i32_0 : i32, i32
  }
  func.func @transform_3(%arg0: i32) -> (i32, i32) {
    %c0_i32 = arith.constant 0 : i32
    %c0_i32_0 = arith.constant 0 : i32
    %c0_i32_1 = arith.constant 0 : i32
    return %c0_i32, %c0_i32_0 : i32, i32
  }
  func.func @transform_4(%arg0: i32) -> (i32, i32) {
    %c0_i32 = arith.constant 0 : i32
    %c0_i32_0 = arith.constant 0 : i32
    return %arg0, %c0_i32 : i32, i32
  }
}

</mosaic_0001>

<llo_original>
// kernel: tile.7
$region0: #{tile.7}
  %s0 = inlined_call_operand.vmem [shape: f32[2,4,256], index: 0, kind: input, shape index: {}]
  %s1 = inlined_call_operand.vmem [shape: f32[8,256], index: 1, kind: output, shape index: {}]
  $region1: #{tile.7} parent=0
    #allocation0 [shape = 'u8[16384]{0}', space=vmem, size = 0x4000, scoped, tag = 'scoped mem for input reshape']
    %s3 = sshll.u32 1, 4
    %s4 = ssub.s32 %s3, 1
    %s5 = smul.addr 4, 3
    %s6 = scalar_lea.vmem %s0, %s5
    %v7 = vld [vmem:[%s6] sm:%s4]
    %s8 = scalar_lea.vmem [#allocation0], 24
    %9 = vst [vmem:[%s8] sm:%s4] %v7
    %s10 = smul.addr 4, 2
    %s11 = scalar_lea.vmem %s0, %s10
    %v12 = vld [vmem:[%s11] sm:%s4]
    %s13 = scalar_lea.vmem [#allocation0], 16
    %14 = vst [vmem:[%s13] sm:%s4] %v12
    %s15 = scalar_lea.vmem %s0, 4
    %v16 = vld [vmem:[%s15] sm:%s4]
    %s17 = scalar_lea.vmem [#allocation0], 8
    %18 = vst [vmem:[%s17] sm:%s4] %v16
    %v19 = vld [vmem:[%s0] sm:%s4]
    %20 = vst [vmem:[#allocation0] sm:%s4] %v19
    %v21 = vld [vmem:[#allocation0] sm:$0xf]
    %22 = vst [vmem:[%s1] sm:$0xf] %v21
    %s23 = scalar_lea.vmem [#allocation0], 8
    %v24 = vld [vmem:[%s23] sm:$0xf]
    %s25 = scalar_lea.vmem %s1, 8
    %26 = vst [vmem:[%s25] sm:$0xf] %v24
    %s27 = scalar_lea.vmem [#allocation0], 16
    %v28 = vld [vmem:[%s27] sm:$0xf]
    %s29 = scalar_lea.vmem %s1, 4
    %30 = vst [vmem:[%s29] sm:$0xf] %v28
    %s31 = scalar_lea.vmem [#allocation0], 24
    %v32 = vld [vmem:[%s31] sm:$0xf]
    %s33 = scalar_lea.vmem %s1, 12
    %34 = vst [vmem:[%s33] sm:$0xf] %v32

// kernel: spectral_noise_suppression.1
$region0: #{spectral_noise_suppression.1}
  #allocation0 [shape = 'u32[]', space=smem, size = 0x4, offset = 0x4, fixed_abs, tag = 'smem constant byte address 0x4 - core index']
  #allocation1 [shape = 'u32[144,128]{1,0:T(1,128)}', space=vmem, size = 0x12000, scoped, tag = 'internal scratch']
  %s0 = inlined_call_operand.vmem [shape: f32[8,256], index: 0, kind: input, shape index: {}]
  %s1 = inlined_call_operand.vmem [shape: f32[256,256], index: 1, kind: input, shape index: {}]
  %s2 = inlined_call_operand.vmem [shape: f32[256,256], index: 2, kind: input, shape index: {}]
  %s3 = inlined_call_operand.vmem [shape: f32[8,256], index: 3, kind: input, shape index: {}]
  %s4 = inlined_call_operand.vmem [shape: f32[8,256], index: 4, kind: output, shape index: {}]
  %s5 = sld [smem:[#allocation0]]
  $region26: #{spectral_noise_suppression.1} parent=0
    _
  %s7 = ssub.s32 1, %s5
  %s8 = scalar_select 0, %s7, %s5
  // Predicated region
  $region2: #{spectral_noise_suppression.1} parent=0 // pred_check
    _
  $region3: #{spectral_noise_suppression.1} parent=0 // pred_check_branch
    %10 = sbr.rel (0) target = $region5
  $region4: #{spectral_noise_suppression.1} parent=0 // pred_region
    _
  $region5: #{spectral_noise_suppression.1} parent=0 // pred_fallthru
    _
  // Predicated region
  $region6: #{spectral_noise_suppression.1} parent=0 // pred_check
    _
  $region7: #{spectral_noise_suppression.1} parent=0 // pred_check_branch
    %12 = sbr.rel (0) target = $region9
  $region8: #{spectral_noise_suppression.1} parent=0 // pred_region
    _
  $region9: #{spectral_noise_suppression.1} parent=0 // pred_fallthru
    _
  // Predicated region
  $region10: #{spectral_noise_suppression.1} parent=0 // pred_check
    _
  $region11: #{spectral_noise_suppression.1} parent=0 // pred_check_branch
    %14 = sbr.rel (0) target = $region13
  $region12: #{spectral_noise_suppression.1} parent=0 // pred_region
    _
  $region13: #{spectral_noise_suppression.1} parent=0 // pred_fallthru
    _
  // Predicated region
  $region14: #{spectral_noise_suppression.1} parent=0 // pred_check
    _
  $region15: #{spectral_noise_suppression.1} parent=0 // pred_check_branch
    %16 = sbr.rel (0) target = $region17
  $region16: #{spectral_noise_suppression.1} parent=0 // pred_region
    _
  $region17: #{spectral_noise_suppression.1} parent=0 // pred_fallthru
    _
  %v17 = vld [vmem:[%s0] sm:$0xff]
  %v18 = vld [vmem:[%s0 + $0x8] sm:$0xff]
  %v19 = vld [vmem:[%s1] sm:$0xff]
  %v20 = vld [vmem:[%s1 + $0x8] sm:$0xff]
  %v21 = vld [vmem:[%s1 + $0x10] sm:$0xff]
  %v22 = vld [vmem:[%s1 + $0x18] sm:$0xff]
  %v23 = vld [vmem:[%s1 + $0x20] sm:$0xff]
  %v24 = vld [vmem:[%s1 + $0x28] sm:$0xff]
  %v25 = vld [vmem:[%s1 + $0x30] sm:$0xff]
  %v26 = vld [vmem:[%s1 + $0x38] sm:$0xff]
  %v27 = vld [vmem:[%s1 + $0x40] sm:$0xff]
  %v28 = vld [vmem:[%s1 + $0x48] sm:$0xff]
  %v29 = vld [vmem:[%s1 + $0x50] sm:$0xff]
  %v30 = vld [vmem:[%s1 + $0x58] sm:$0xff]
  %v31 = vld [vmem:[%s1 + $0x60] sm:$0xff]
  %v32 = vld [vmem:[%s1 + $0x68] sm:$0xff]
  %v33 = vld [vmem:[%s1 + $0x70] sm:$0xff]
  %v34 = vld [vmem:[%s1 + $0x78] sm:$0xff]
  %v35 = vld [vmem:[%s1 + $0x80] sm:$0xff]
  %v36 = vld [vmem:[%s1 + $0x88] sm:$0xff]
  %v37 = vld [vmem:[%s1 + $0x90] sm:$0xff]
  %v38 = vld [vmem:[%s1 + $0x98] sm:$0xff]
  %v39 = vld [vmem:[%s1 + $0xa0] sm:$0xff]
  %v40 = vld [vmem:[%s1 + $0xa8] sm:$0xff]
  %v41 = vld [vmem:[%s1 + $0xb0] sm:$0xff]
  %v42 = vld [vmem:[%s1 + $0xb8] sm:$0xff]
  %v43 = vld [vmem:[%s1 + $0xc0] sm:$0xff]
  %v44 = vld [vmem:[%s1 + $0xc8] sm:$0xff]
  %v45 = vld [vmem:[%s1 + $0xd0] sm:$0xff]
  %v46 = vld [vmem:[%s1 + $0xd8] sm:$0xff]
  %v47 = vld [vmem:[%s1 + $0xe0] sm:$0xff]
  %v48 = vld [vmem:[%s1 + $0xe8] sm:$0xff]
  %v49 = vld [vmem:[%s1 + $0xf0] sm:$0xff]
  %v50 = vld [vmem:[%s1 + $0xf8] sm:$0xff]
  %v51 = vld [vmem:[%s1 + $0x100] sm:$0xff]
  %v52 = vld [vmem:[%s1 + $0x108] sm:$0xff]
  %v53 = vld [vmem:[%s1 + $0x110] sm:$0xff]
  %v54 = vld [vmem:[%s1 + $0x118] sm:$0xff]
  %v55 = vld [vmem:[%s1 + $0x120] sm:$0xff]
  %v56 = vld [vmem:[%s1 + $0x128] sm:$0xff]
  %v57 = vld [vmem:[%s1 + $0x130] sm:$0xff]
  %v58 = vld [vmem:[%s1 + $0x138] sm:$0xff]
  %v59 = vld [vmem:[%s1 + $0x140] sm:$0xff]
  %v60 = vld [vmem:[%s1 + $0x148] sm:$0xff]
  %v61 = vld [vmem:[%s1 + $0x150] sm:$0xff]
  %v62 = vld [vmem:[%s1 + $0x158] sm:$0xff]
  %v63 = vld [vmem:[%s1 + $0x160] sm:$0xff]
  %v64 = vld [vmem:[%s1 + $0x168] sm:$0xff]
  %v65 = vld [vmem:[%s1 + $0x170] sm:$0xff]
  %v66 = vld [vmem:[%s1 + $0x178] sm:$0xff]
  %v67 = vld [vmem:[%s1 + $0x180] sm:$0xff]
  %v68 = vld [vmem:[%s1 + $0x188] sm:$0xff]
  %v69 = vld [vmem:[%s1 + $0x190] sm:$0xff]
  %v70 = vld [vmem:[%s1 + $0x198] sm:$0xff]
  %v71 = vld [vmem:[%s1 + $0x1a0] sm:$0xff]
  %v72 = vld [vmem:[%s1 + $0x1a8] sm:$0xff]
  %v73 = vld [vmem:[%s1 + $0x1b0] sm:$0xff]
  %v74 = vld [vmem:[%s1 + $0x1b8] sm:$0xff]
  %v75 = vld [vmem:[%s1 + $0x1c0] sm:$0xff]
  %v76 = vld [vmem:[%s1 + $0x1c8] sm:$0xff]
  %v77 = vld [vmem:[%s1 + $0x1d0] sm:$0xff]
  %v78 = vld [vmem:[%s1 + $0x1d8] sm:$0xff]
  %v79 = vld [vmem:[%s1 + $0x1e0] sm:$0xff]
  %v80 = vld [vmem:[%s1 + $0x1e8] sm:$0xff]
  %v81 = vld [vmem:[%s1 + $0x1f0] sm:$0xff]
  %v82 = vld [vmem:[%s1 + $0x1f8] sm:$0xff]
  %83 = vmatprep.subr.mxu0 %v50
  %84 = vmatpush1.msra.mxu0 %v49
  %85 = vmatprep.subr.mxu0 %v48
  %86 = vmatpush1.msra.mxu0 %v47
  %87 = vmatprep.subr.mxu0 %v46
  %88 = vmatpush1.msra.mxu0 %v45
  %89 = vmatprep.subr.mxu0 %v44
  %90 = vmatpush1.msra.mxu0 %v43
  %91 = vmatprep.subr.mxu0 %v42
  %92 = vmatpush1.msra.mxu0 %v41
  %93 = vmatprep.subr.mxu0 %v40
  %94 = vmatpush1.msra.mxu0 %v39
  %95 = vmatprep.subr.mxu0 %v38
  %96 = vmatpush1.msra.mxu0 %v37
  %97 = vmatprep.subr.mxu0 %v36
  %98 = vmatpush1.msra.mxu0 %v35
  %99 = vmatprep.subr.mxu0 %v34
  %100 = vmatpush1.msra.mxu0 %v33
  %101 = vmatprep.subr.mxu0 %v32
  %102 = vmatpush1.msra.mxu0 %v31
  %103 = vmatprep.subr.mxu0 %v30
  %104 = vmatpush1.msra.mxu0 %v29
  %105 = vmatprep.subr.mxu0 %v28
  %106 = vmatpush1.msra.mxu0 %v27
  %107 = vmatprep.subr.mxu0 %v26
  %108 = vmatpush1.msra.mxu0 %v25
  %109 = vmatprep.subr.mxu0 %v24
  %110 = vmatpush1.msra.mxu0 %v23
  %111 = vmatprep.subr.mxu0 %v22
  %112 = vmatpush1.msra.mxu0 %v21
  %113 = vmatprep.subr.mxu0 %v20
  %114 = vmatpush1.msra.mxu0 %v19
  %115 = vmatprep.subr.mxu0 %v82
  %116 = vmatpush2.msra.mxu0 %v81
  %117 = vmatprep.subr.mxu0 %v80
  %118 = vmatpush2.msra.mxu0 %v79
  %119 = vmatprep.subr.mxu0 %v78
  %120 = vmatpush2.msra.mxu0 %v77
  %121 = vmatprep.subr.mxu0 %v76
  %122 = vmatpush2.msra.mxu0 %v75
  %123 = vmatprep.subr.mxu0 %v74
  %124 = vmatpush2.msra.mxu0 %v73
  %125 = vmatprep.subr.mxu0 %v72
  %126 = vmatpush2.msra.mxu0 %v71
  %127 = vmatprep.subr.mxu0 %v70
  %128 = vmatpush2.msra.mxu0 %v69
  %129 = vmatprep.subr.mxu0 %v68
  %130 = vmatpush2.msra.mxu0 %v67
  %131 = vmatprep.subr.mxu0 %v66
  %132 = vmatpush2.msra.mxu0 %v65
  %133 = vmatprep.subr.mxu0 %v64
  %134 = vmatpush2.msra.mxu0 %v63
  %135 = vmatprep.subr.mxu0 %v62
  %136 = vmatpush2.msra.mxu0 %v61
  %137 = vmatprep.subr.mxu0 %v60
  %138 = vmatpush2.msra.mxu0 %v59
  %139 = vmatprep.subr.mxu0 %v58
  %140 = vmatpush2.msra.mxu0 %v57
  %141 = vmatprep.subr.mxu0 %v56
  %142 = vmatpush2.msra.mxu0 %v55
  %143 = vmatprep.subr.mxu0 %v54
  %144 = vmatpush2.msra.mxu0 %v53
  %145 = vmatprep.subr.mxu0 %v52
  %146 = vmatpush2.msra.mxu0 %v51
  %147 = vmatprep.mubr.f32.mxu0 %v18
  %148 = vmatmul.mubr.f32.gmra.mxu0 %v17
  %v149 = vpop.f32.mrf.mxu0
  %v150 = vadd.f32 0.0, %v149
  %v151 = vpop.f32.mrf.mxu0
  %v152 = vadd.f32 0.0, %v151
  %153 = vdwg.mxu0
  %v154 = vld [vmem:[%s3] sm:$0xff]
  %v155 = vld [vmem:[%s3 + $0x8] sm:$0xff]
  %v156 = vmul.f32 %v150, %v154
  %v157 = vmul.f32 %v152, %v155
  %v158 = vld [vmem:[%s2] sm:$0xff]
  %v159 = vld [vmem:[%s2 + $0x8] sm:$0xff]
  %v160 = vld [vmem:[%s2 + $0x10] sm:$0xff]
  %v161 = vld [vmem:[%s2 + $0x18] sm:$0xff]
  %v162 = vld [vmem:[%s2 + $0x20] sm:$0xff]
  %v163 = vld [vmem:[%s2 + $0x28] sm:$0xff]
  %v164 = vld [vmem:[%s2 + $0x30] sm:$0xff]
  %v165 = vld [vmem:[%s2 + $0x38] sm:$0xff]
  %v166 = vld [vmem:[%s2 + $0x40] sm:$0xff]
  %v167 = vld [vmem:[%s2 + $0x48] sm:$0xff]
  %v168 = vld [vmem:[%s2 + $0x50] sm:$0xff]
  %v169 = vld [vmem:[%s2 + $0x58] sm:$0xff]
  %v170 = vld [vmem:[%s2 + $0x60] sm:$0xff]
  %v171 = vld [vmem:[%s2 + $0x68] sm:$0xff]
  %v172 = vld [vmem:[%s2 + $0x70] sm:$0xff]
  %v173 = vld [vmem:[%s2 + $0x78] sm:$0xff]
  %v174 = vld [vmem:[%s2 + $0x80] sm:$0xff]
  %v175 = vld [vmem:[%s2 + $0x88] sm:$0xff]
  %v176 = vld [vmem:[%s2 + $0x90] sm:$0xff]
  %v177 = vld [vmem:[%s2 + $0x98] sm:$0xff]
  %v178 = vld [vmem:[%s2 + $0xa0] sm:$0xff]
  %v179 = vld [vmem:[%s2 + $0xa8] sm:$0xff]
  %v180 = vld [vmem:[%s2 + $0xb0] sm:$0xff]
  %v181 = vld [vmem:[%s2 + $0xb8] sm:$0xff]
  %v182 = vld [vmem:[%s2 + $0xc0] sm:$0xff]
  %v183 = vld [vmem:[%s2 + $0xc8] sm:$0xff]
  %v184 = vld [vmem:[%s2 + $0xd0] sm:$0xff]
  %v185 = vld [vmem:[%s2 + $0xd8] sm:$0xff]
  %v186 = vld [vmem:[%s2 + $0xe0] sm:$0xff]
  %v187 = vld [vmem:[%s2 + $0xe8] sm:$0xff]
  %v188 = vld [vmem:[%s2 + $0xf0] sm:$0xff]
  %v189 = vld [vmem:[%s2 + $0xf8] sm:$0xff]
  %v190 = vld [vmem:[%s2 + $0x100] sm:$0xff]
  %v191 = vld [vmem:[%s2 + $0x108] sm:$0xff]
  %v192 = vld [vmem:[%s2 + $0x110] sm:$0xff]
  %v193 = vld [vmem:[%s2 + $0x118] sm:$0xff]
  %v194 = vld [vmem:[%s2 + $0x120] sm:$0xff]
  %v195 = vld [vmem:[%s2 + $0x128] sm:$0xff]
  %v196 = vld [vmem:[%s2 + $0x130] sm:$0xff]
  %v197 = vld [vmem:[%s2 + $0x138] sm:$0xff]
  %v198 = vld [vmem:[%s2 + $0x140] sm:$0xff]
  %v199 = vld [vmem:[%s2 + $0x148] sm:$0xff]
  %v200 = vld [vmem:[%s2 + $0x150] sm:$0xff]
  %v201 = vld [vmem:[%s2 + $0x158] sm:$0xff]
  %v202 = vld [vmem:[%s2 + $0x160] sm:$0xff]
  %v203 = vld [vmem:[%s2 + $0x168] sm:$0xff]
  %v204 = vld [vmem:[%s2 + $0x170] sm:$0xff]
  %v205 = vld [vmem:[%s2 + $0x178] sm:$0xff]
  %v206 = vld [vmem:[%s2 + $0x180] sm:$0xff]
  %v207 = vld [vmem:[%s2 + $0x188] sm:$0xff]
  %v208 = vld [vmem:[%s2 + $0x190] sm:$0xff]
  %v209 = vld [vmem:[%s2 + $0x198] sm:$0xff]
  %v210 = vld [vmem:[%s2 + $0x1a0] sm:$0xff]
  %v211 = vld [vmem:[%s2 + $0x1a8] sm:$0xff]
  %v212 = vld [vmem:[%s2 + $0x1b0] sm:$0xff]
  %v213 = vld [vmem:[%s2 + $0x1b8] sm:$0xff]
  %v214 = vld [vmem:[%s2 + $0x1c0] sm:$0xff]
  %v215 = vld [vmem:[%s2 + $0x1c8] sm:$0xff]
  %v216 = vld [vmem:[%s2 + $0x1d0] sm:$0xff]
  %v217 = vld [vmem:[%s2 + $0x1d8] sm:$0xff]
  %v218 = vld [vmem:[%s2 + $0x1e0] sm:$0xff]
  %v219 = vld [vmem:[%s2 + $0x1e8] sm:$0xff]
  %v220 = vld [vmem:[%s2 + $0x1f0] sm:$0xff]
  %v221 = vld [vmem:[%s2 + $0x1f8] sm:$0xff]
  %222 = vmatprep.subr.mxu0 %v189
  %223 = vmatpush1.msra.mxu0 %v188
  %224 = vmatprep.subr.mxu0 %v187
  %225 = vmatpush1.msra.mxu0 %v186
  %226 = vmatprep.subr.mxu0 %v185
  %227 = vmatpush1.msra.mxu0 %v184
  %228 = vmatprep.subr.mxu0 %v183
  %229 = vmatpush1.msra.mxu0 %v182
  %230 = vmatprep.subr.mxu0 %v181
  %231 = vmatpush1.msra.mxu0 %v180
  %232 = vmatprep.subr.mxu0 %v179
  %233 = vmatpush1.msra.mxu0 %v178
  %234 = vmatprep.subr.mxu0 %v177
  %235 = vmatpush1.msra.mxu0 %v176
  %236 = vmatprep.subr.mxu0 %v175
  %237 = vmatpush1.msra.mxu0 %v174
  %238 = vmatprep.subr.mxu0 %v173
  %239 = vmatpush1.msra.mxu0 %v172
  %240 = vmatprep.subr.mxu0 %v171
  %241 = vmatpush1.msra.mxu0 %v170
  %242 = vmatprep.subr.mxu0 %v169
  %243 = vmatpush1.msra.mxu0 %v168
  %244 = vmatprep.subr.mxu0 %v167
  %245 = vmatpush1.msra.mxu0 %v166
  %246 = vmatprep.subr.mxu0 %v165
  %247 = vmatpush1.msra.mxu0 %v164
  %248 = vmatprep.subr.mxu0 %v163
  %249 = vmatpush1.msra.mxu0 %v162
  %250 = vmatprep.subr.mxu0 %v161
  %251 = vmatpush1.msra.mxu0 %v160
  %252 = vmatprep.subr.mxu0 %v159
  %253 = vmatpush1.msra.mxu0 %v158
  %254 = vmatprep.subr.mxu0 %v221
  %255 = vmatpush2.msra.mxu0 %v220
  %256 = vmatprep.subr.mxu0 %v219
  %257 = vmatpush2.msra.mxu0 %v218
  %258 = vmatprep.subr.mxu0 %v217
  %259 = vmatpush2.msra.mxu0 %v216
  %260 = vmatprep.subr.mxu0 %v215
  %261 = vmatpush2.msra.mxu0 %v214
  %262 = vmatprep.subr.mxu0 %v213
  %263 = vmatpush2.msra.mxu0 %v212
  %264 = vmatprep.subr.mxu0 %v211
  %265 = vmatpush2.msra.mxu0 %v210
  %266 = vmatprep.subr.mxu0 %v209
  %267 = vmatpush2.msra.mxu0 %v208
  %268 = vmatprep.subr.mxu0 %v207
  %269 = vmatpush2.msra.mxu0 %v206
  %270 = vmatprep.subr.mxu0 %v205
  %271 = vmatpush2.msra.mxu0 %v204
  %272 = vmatprep.subr.mxu0 %v203
  %273 = vmatpush2.msra.mxu0 %v202
  %274 = vmatprep.subr.mxu0 %v201
  %275 = vmatpush2.msra.mxu0 %v200
  %276 = vmatprep.subr.mxu0 %v199
  %277 = vmatpush2.msra.mxu0 %v198
  %278 = vmatprep.subr.mxu0 %v197
  %279 = vmatpush2.msra.mxu0 %v196
  %280 = vmatprep.subr.mxu0 %v195
  %281 = vmatpush2.msra.mxu0 %v194
  %282 = vmatprep.subr.mxu0 %v193
  %283 = vmatpush2.msra.mxu0 %v192
  %284 = vmatprep.subr.mxu0 %v191
  %285 = vmatpush2.msra.mxu0 %v190
  %286 = vmatprep.mubr.f32.mxu0 %v157
  %287 = vmatmul.mubr.f32.gmra.mxu0 %v156
  %v288 = vpop.f32.mrf.mxu0
  %v289 = vadd.f32 0.0, %v288
  %v290 = vpop.f32.mrf.mxu0
  %v291 = vadd.f32 0.0, %v290
  %292 = vdwg.mxu0
  %v293 = vmul.f32 %v17, %v289
  %v294 = vmul.f32 %v18, %v291
  %295 = vst [vmem:[%s4] sm:$0xff] %v293
  %296 = vst [vmem:[%s4 + $0x8] sm:$0xff] %v294
  // Predicated region
  $region18: #{spectral_noise_suppression.1} parent=0 // pred_check
    _
  $region19: #{spectral_noise_suppression.1} parent=0 // pred_check_branch
    %298 = sbr.rel (0) target = $region21
  $region20: #{spectral_noise_suppression.1} parent=0 // pred_region
    _
  $region21: #{spectral_noise_suppression.1} parent=0 // pred_fallthru
    _
  // Predicated region
  $region22: #{spectral_noise_suppression.1} parent=0 // pred_check
    _
  $region23: #{spectral_noise_suppression.1} parent=0 // pred_check_branch
    %300 = sbr.rel (0) target = $region25
  $region24: #{spectral_noise_suppression.1} parent=0 // pred_region
    _
  $region25: #{spectral_noise_suppression.1} parent=0 // pred_fallthru
    _

</llo_original>
